<compile_context>
chip_gen: v5e
topology: v5e:2x2
jax: 0.10.0
libtpu: 0.0.40
codegen_flags: <defaults>
</compile_context>

<pallas_src>
import jax
import jax.numpy as jnp
from jax.experimental import pallas as pl
from jax.experimental.pallas import tpu as pltpu


def _round_up(x, m):
    return ((x + m - 1) // m) * m


def text_encoder_kernel(emb_ref, mask_ref, w_pool_ref, b_pool_ref,
                        w_proj_ref, b_proj_ref, out_ref, sum_acc, cnt_acc):
    s = pl.program_id(1)

    # ---- init pooling accumulators at the first sequence tile --------------
    @pl.when(s == 0)
    def _():
        sum_acc[...] = jnp.zeros_like(sum_acc)
        cnt_acc[...] = jnp.zeros_like(cnt_acc)

    # ---- masked sum over this sequence tile (stand-in backbone pooling) ----
    # bf16 stream upcast to f32 before the VPU multiply (v5e VPU has no bf16);
    # the sequence reduction is a sublane/XLU reduce; accumulate in f32.
    emb = emb_ref[...].astype(jnp.float32)            # (B_TILE, S_TILE, Hp)
    mask = mask_ref[...]                              # (B_TILE, S_TILE) f32
    sum_acc[...] += jnp.sum(emb * mask[:, :, None], axis=1)
    cnt_acc[...] += jnp.sum(mask, axis=1, keepdims=True)

    # ---- finalize: pooler + code_projector + L2 normalize (last S tile) ----
    @pl.when(s == pl.num_programs(1) - 1)
    def _():
        counts = jnp.maximum(cnt_acc[...], 1.0)                       # (B_TILE, 1)
        hidden = sum_acc[...] * pl.reciprocal(counts, approx=False)   # (B_TILE, Hp)

        # BERT-style pooler: tanh(hidden @ Wp + bp) -> pooler_output
        pooled = jnp.tanh(
            jnp.dot(hidden, w_pool_ref[...],
                    preferred_element_type=jnp.float32)
            + b_pool_ref[...])                                        # (B_TILE, Hp)

        # code_projector: torch.nn.Linear(hidden_size, code_size)
        codes = (jnp.dot(pooled, w_proj_ref[...],
                         preferred_element_type=jnp.float32)
                 + b_proj_ref[...])                                   # (B_TILE, Cp)

        # torch.nn.functional.normalize: x / max(||x||_2, 1e-12), all in f32.
        # Padded code lanes are exactly zero, so they do not affect the norm.
        sumsq = jnp.sum(codes * codes, axis=1, keepdims=True)
        out_ref[...] = codes * jax.lax.rsqrt(jnp.maximum(sumsq, 1e-24))


def text_encoder_forward(text_tokens, text_mask, padded_params, *,
                         b_tile=8, s_tile=128):
    embed = padded_params["embed"]      # (V, Hp)  bf16, zero-padded lanes
    w_pool = padded_params["w_pool"]    # (Hp, Hp) f32
    b_pool = padded_params["b_pool"]    # (1, Hp)  f32
    w_proj = padded_params["w_proj"]    # (Hp, Cp) f32
    b_proj = padded_params["b_proj"]    # (1, Cp)  f32
    code_size = padded_params["code_size"]

    Hp = embed.shape[1]
    Cp = w_proj.shape[1]

    B, S = text_tokens.shape
    s_tile = min(s_tile, _round_up(S, 16))      # bf16 sublane multiple
    Bp = _round_up(B, b_tile)
    Sp = _round_up(S, s_tile)
    num_b, num_s = Bp // b_tile, Sp // s_tile

    # Pad tokens/mask; padded positions carry mask == 0 so they never
    # contribute to the pooled sum or the token count.
    tokens_p = jnp.zeros((Bp, Sp), text_tokens.dtype).at[:B, :S].set(text_tokens)
    mask_p = jnp.zeros((Bp, Sp), jnp.float32).at[:B, :S].set(
        text_mask.astype(jnp.float32))

    # Embedding gather emits the dominant (Bp, Sp, Hp) stream directly in bf16.
    emb = jnp.take(embed, tokens_p, axis=0)

    # Per-step VMEM footprint (double-buffered streams + resident weights +
    # accumulators); explicit limit sized so the same tiling fits v7x (64 MiB).
    vmem_bytes = (
        2 * b_tile * s_tile * Hp * 2          # emb double buffer (bf16)
        + 2 * b_tile * s_tile * 4             # mask double buffer (f32)
        + 2 * (Hp * Hp + Hp) * 4              # pooler weight + bias
        + 2 * (Hp * Cp + Cp) * 4              # projector weight + bias
        + 2 * b_tile * Cp * 4                 # output buffers
        + (b_tile * Hp + b_tile) * 4          # accumulators
    )
    vmem_limit = int(min(max(2 * vmem_bytes, 8 << 20), 56 << 20))

    cost = pl.CostEstimate(
        flops=2 * Bp * Sp * Hp + 2 * Bp * Hp * Hp + 2 * Bp * Hp * Cp,
        transcendentals=Bp * (Hp + 1),
        bytes_accessed=(Bp * Sp * Hp * 2 + Bp * Sp * 4
                        + (Hp * Hp + Hp + Hp * Cp + Cp) * 4
                        + Bp * Cp * 4),
    )

    out = pl.pallas_call(
        text_encoder_kernel,
        out_shape=jax.ShapeDtypeStruct((Bp, Cp), jnp.float32),
        grid_spec=pltpu.PrefetchScalarGridSpec(
            num_scalar_prefetch=0,
            grid=(num_b, num_s),
            in_specs=[
                pl.BlockSpec((b_tile, s_tile, Hp), lambda b, s: (b, s, 0)),
                pl.BlockSpec((b_tile, s_tile), lambda b, s: (b, s)),
                pl.BlockSpec((Hp, Hp), lambda b, s: (0, 0)),
                pl.BlockSpec((1, Hp), lambda b, s: (0, 0)),
                pl.BlockSpec((Hp, Cp), lambda b, s: (0, 0)),
                pl.BlockSpec((1, Cp), lambda b, s: (0, 0)),
            ],
            out_specs=pl.BlockSpec((b_tile, Cp), lambda b, s: (b, 0)),
            scratch_shapes=[pltpu.VMEM((b_tile, Hp), jnp.float32),
                            pltpu.VMEM((b_tile, 1), jnp.float32)],
        ),
        compiler_params=pltpu.CompilerParams(
            dimension_semantics=("parallel", "arbitrary"),
            vmem_limit_bytes=vmem_limit),
        cost_estimate=cost,
    )(emb, mask_p, w_pool, b_pool, w_proj, b_proj)

    return out[:B, :code_size]


def init_params(key, vocab_size, hidden_size, code_size):
    k_emb, k_wp, k_bp, k_wj, k_bj = jax.random.split(key, 5)
    scale_h = 1.0 / jnp.sqrt(hidden_size)
    return {
        "embed":  jax.random.normal(k_emb, (vocab_size, hidden_size),
                                    jnp.float32) * 0.02,
        "w_pool": jax.random.uniform(k_wp, (hidden_size, hidden_size),
                                     jnp.float32, -scale_h, scale_h),
        "b_pool": jax.random.uniform(k_bp, (1, hidden_size),
                                     jnp.float32, -scale_h, scale_h),
        "w_proj": jax.random.uniform(k_wj, (hidden_size, code_size),
                                     jnp.float32, -scale_h, scale_h),
        "b_proj": jax.random.uniform(k_bj, (1, code_size),
                                     jnp.float32, -scale_h, scale_h),
    }


def pad_params(params, *, lane=128):
    """One-time lane padding: H, C -> multiples of 128; embedding table in bf16."""
    H = params["w_pool"].shape[0]
    C = params["w_proj"].shape[1]
    V = params["embed"].shape[0]
    Hp, Cp = _round_up(H, lane), _round_up(C, lane)
    embed = jnp.zeros((V, Hp), jnp.bfloat16).at[:, :H].set(
        params["embed"].astype(jnp.bfloat16))
    w_pool = jnp.zeros((Hp, Hp), jnp.float32).at[:H, :H].set(params["w_pool"])
    b_pool = jnp.zeros((1, Hp), jnp.float32).at[:, :H].set(params["b_pool"])
    w_proj = jnp.zeros((Hp, Cp), jnp.float32).at[:H, :C].set(params["w_proj"])
    b_proj = jnp.zeros((1, Cp), jnp.float32).at[:, :C].set(params["b_proj"])
    return {"embed": embed, "w_pool": w_pool, "b_pool": b_pool,
            "w_proj": w_proj, "b_proj": b_proj,
            "hidden_size": H, "code_size": C}


def text_encoder_reference(text_tokens, text_mask, params):
    """Pure-JAX reference matching the kernel numerics (bf16-rounded embeddings)."""
    emb = jnp.take(params["embed"].astype(jnp.bfloat16), text_tokens,
                   axis=0).astype(jnp.float32)
    m = text_mask.astype(jnp.float32)
    hidden = jnp.sum(emb * m[:, :, None], axis=1) / jnp.maximum(
        jnp.sum(m, axis=1, keepdims=True), 1.0)
    hp = jax.lax.Precision.HIGHEST
    pooled = jnp.tanh(jnp.dot(hidden, params["w_pool"], precision=hp)
                      + params["b_pool"])
    codes = jnp.dot(pooled, params["w_proj"], precision=hp) + params["b_proj"]
    norm = jnp.maximum(jnp.linalg.norm(codes, axis=1, keepdims=True), 1e-12)
    return codes / norm


if __name__ == "__main__":
    B, S = 2, 8            # batch, sequence length
    VOCAB = 64
    HIDDEN = 32            # backbone_encoder.config.hidden_size
    CODE = 16              # code_size

    key = jax.random.PRNGKey(0)
    k_params, k_tok, k_len = jax.random.split(key, 3)

    params = init_params(k_params, VOCAB, HIDDEN, CODE)
    padded = pad_params(params)

    text_tokens = jax.random.randint(k_tok, (B, S), 0, VOCAB, jnp.int32)
    lengths = jax.random.randint(k_len, (B,), 3, S + 1, jnp.int32)
    text_mask = (jnp.arange(S)[None, :] < lengths[:, None]).astype(jnp.int32)

    text_codes = text_encoder_forward(text_tokens, text_mask, padded)
    text_codes = jax.block_until_ready(text_codes)

    assert text_codes.shape == (B, CODE)
    # rows are unit-norm after the F.normalize-equivalent
    row_norms = jnp.linalg.norm(text_codes, axis=1)
    assert bool(jnp.all(jnp.abs(row_norms - 1.0) < 1e-4))
    # matches the pure-JAX reference
    ref_codes = text_encoder_reference(text_tokens, text_mask, params)
    assert bool(jnp.all(jnp.abs(text_codes - ref_codes) < 2e-2))

    print("KERNEL_OK")
</pallas_src>

<mosaic_0001>
module attributes {stable_mosaic.version = 11 : i64} {
  func.func @text_encoder_kernel(%arg0: i32, %arg1: i32, %arg2: memref<8x16x128xbf16, #tpu.memory_space<vmem>>, %arg3: memref<8x16xf32, #tpu.memory_space<vmem>>, %arg4: memref<128x128xf32, #tpu.memory_space<vmem>>, %arg5: memref<1x128xf32, #tpu.memory_space<vmem>>, %arg6: memref<128x128xf32, #tpu.memory_space<vmem>>, %arg7: memref<1x128xf32, #tpu.memory_space<vmem>>, %arg8: memref<8x128xf32, #tpu.memory_space<vmem>>, %arg9: memref<8x128xf32, #tpu.memory_space<vmem>>, %arg10: memref<8x1xf32, #tpu.memory_space<vmem>>) attributes {dimension_semantics = [#tpu.dimension_semantics<parallel>, #tpu.dimension_semantics<arbitrary>], iteration_bounds = array<i64: 1, 1>, scalar_prefetch = 0 : i64, scratch_operands = 2 : i64, tpu.core_type = #tpu.core_type<tc>, window_params = [{transform_indices = @transform_0, window_bounds = array<i64: 8, 16, 128>}, {transform_indices = @transform_1, window_bounds = array<i64: 8, 16>}, {pipeline_mode = #tpu.pipeline_mode<synchronous>, transform_indices = @transform_2, window_bounds = array<i64: 128, 128>}, {pipeline_mode = #tpu.pipeline_mode<synchronous>, transform_indices = @transform_3, window_bounds = array<i64: 1, 128>}, {pipeline_mode = #tpu.pipeline_mode<synchronous>, transform_indices = @transform_4, window_bounds = array<i64: 128, 128>}, {pipeline_mode = #tpu.pipeline_mode<synchronous>, transform_indices = @transform_5, window_bounds = array<i64: 1, 128>}, {transform_indices = @transform_6, window_bounds = array<i64: 8, 128>}]} {
    %c0_i32 = arith.constant 0 : i32
    %0 = arith.cmpi eq, %arg1, %c0_i32 : i32
    %1 = arith.extui %0 : i1 to i32
    %c0_i32_0 = arith.constant 0 : i32
    %2 = arith.cmpi ne, %1, %c0_i32_0 : i32
    scf.if %2 {
      %cst_16 = arith.constant 0.000000e+00 : f32
      %21 = vector.broadcast %cst_16 : f32 to vector<8x128xf32>
      %c0_17 = arith.constant 0 : index
      %c0_18 = arith.constant 0 : index
      %22 = vector.load %arg9[%c0_17, %c0_18] : memref<8x128xf32, #tpu.memory_space<vmem>>, vector<8x128xf32>
      tpu.vector_store %arg9[%c0_17, %c0_18], %21 {strides = array<i32>} : memref<8x128xf32, #tpu.memory_space<vmem>>, vector<8x128xf32>,
      %cst_19 = arith.constant 0.000000e+00 : f32
      %23 = vector.broadcast %cst_19 : f32 to vector<8x1xf32>
      %c0_20 = arith.constant 0 : index
      %c0_21 = arith.constant 0 : index
      %24 = vector.load %arg10[%c0_20, %c0_21] : memref<8x1xf32, #tpu.memory_space<vmem>>, vector<8x1xf32>
      tpu.vector_store %arg10[%c0_20, %c0_21], %23 {strides = array<i32>} : memref<8x1xf32, #tpu.memory_space<vmem>>, vector<8x1xf32>,
    } else {
    }
    %c0 = arith.constant 0 : index
    %c0_1 = arith.constant 0 : index
    %c0_2 = arith.constant 0 : index
    %3 = vector.load %arg2[%c0, %c0_1, %c0_2] : memref<8x16x128xbf16, #tpu.memory_space<vmem>>, vector<8x16x128xbf16>
    %4 = arith.extf %3 : vector<8x16x128xbf16> to vector<8x16x128xf32>
    %c0_3 = arith.constant 0 : index
    %c0_4 = arith.constant 0 : index
    %5 = vector.load %arg3[%c0_3, %c0_4] : memref<8x16xf32, #tpu.memory_space<vmem>>, vector<8x16xf32>
    %c0_5 = arith.constant 0 : index
    %c0_6 = arith.constant 0 : index
    %6 = vector.load %arg9[%c0_5, %c0_6] : memref<8x128xf32, #tpu.memory_space<vmem>>, vector<8x128xf32>
    %7 = vector.shape_cast %5 : vector<8x16xf32> to vector<8x16x1xf32>
    %8 = vector.broadcast %7 : vector<8x16x1xf32> to vector<8x16x128xf32>
    %9 = arith.mulf %4, %8 : vector<8x16x128xf32>
    %cst = arith.constant dense<0.000000e+00> : vector<8x128xf32>
    %10 = vector.multi_reduction <add>, %9, %cst [1] : vector<8x16x128xf32> to vector<8x128xf32>
    %11 = arith.addf %6, %10 : vector<8x128xf32>
    %c0_7 = arith.constant 0 : index
    %c0_8 = arith.constant 0 : index
    %12 = vector.load %arg9[%c0_7, %c0_8] : memref<8x128xf32, #tpu.memory_space<vmem>>, vector<8x128xf32>
    tpu.vector_store %arg9[%c0_7, %c0_8], %11 {strides = array<i32>} : memref<8x128xf32, #tpu.memory_space<vmem>>, vector<8x128xf32>,
    %c0_9 = arith.constant 0 : index
    %c0_10 = arith.constant 0 : index
    %13 = vector.load %arg10[%c0_9, %c0_10] : memref<8x1xf32, #tpu.memory_space<vmem>>, vector<8x1xf32>
    %cst_11 = arith.constant dense<0.000000e+00> : vector<8xf32>
    %14 = vector.multi_reduction <add>, %5, %cst_11 [1] : vector<8x16xf32> to vector<8xf32>
    %15 = vector.shape_cast %14 : vector<8xf32> to vector<8x1xf32>
    %16 = arith.addf %13, %15 : vector<8x1xf32>
    %c0_12 = arith.constant 0 : index
    %c0_13 = arith.constant 0 : index
    %17 = vector.load %arg10[%c0_12, %c0_13] : memref<8x1xf32, #tpu.memory_space<vmem>>, vector<8x1xf32>
    tpu.vector_store %arg10[%c0_12, %c0_13], %16 {strides = array<i32>} : memref<8x1xf32, #tpu.memory_space<vmem>>, vector<8x1xf32>,
    %c0_i32_14 = arith.constant 0 : i32
    %18 = arith.cmpi eq, %arg1, %c0_i32_14 : i32
    %19 = arith.extui %18 : i1 to i32
    %c0_i32_15 = arith.constant 0 : i32
    %20 = arith.cmpi ne, %19, %c0_i32_15 : i32
    scf.if %20 {
      %c0_16 = arith.constant 0 : index
      %c0_17 = arith.constant 0 : index
      %21 = vector.load %arg10[%c0_16, %c0_17] : memref<8x1xf32, #tpu.memory_space<vmem>>, vector<8x1xf32>
      %cst_18 = arith.constant 1.000000e+00 : f32
      %22 = vector.broadcast %cst_18 : f32 to vector<8x1xf32>
      %23 = arith.maximumf %21, %22 : vector<8x1xf32>
      %c0_19 = arith.constant 0 : index
      %c0_20 = arith.constant 0 : index
      %24 = vector.load %arg9[%c0_19, %c0_20] : memref<8x128xf32, #tpu.memory_space<vmem>>, vector<8x128xf32>
      %25 = tpu.reciprocal %23 : vector<8x1xf32> -> vector<8x1xf32>
      %26 = vector.broadcast %25 : vector<8x1xf32> to vector<8x128xf32>
      %27 = arith.mulf %24, %26 : vector<8x128xf32>
      %c0_21 = arith.constant 0 : index
      %c0_22 = arith.constant 0 : index
      %28 = vector.load %arg4[%c0_21, %c0_22] : memref<128x128xf32, #tpu.memory_space<vmem>>, vector<128x128xf32>
      %cst_23 = arith.constant dense<0.000000e+00> : vector<8x128xf32>
      %29 = tpu.matmul %27, %28, %cst_23 {dimension_numbers = #tpu.dot_dimension_numbers<[1], [0], [0], [1], [0, 0, 1, 1], [], []>} : vector<8x128xf32>, vector<128x128xf32>, vector<8x128xf32> -> vector<8x128xf32>
      %c0_24 = arith.constant 0 : index
      %c0_25 = arith.constant 0 : index
      %30 = vector.load %arg5[%c0_24, %c0_25] : memref<1x128xf32, #tpu.memory_space<vmem>>, vector<1x128xf32>
      %31 = vector.broadcast %30 : vector<1x128xf32> to vector<8x128xf32>
      %32 = arith.addf %29, %31 : vector<8x128xf32>
      %33 = math.tanh %32 : vector<8x128xf32>
      %c0_26 = arith.constant 0 : index
      %c0_27 = arith.constant 0 : index
      %34 = vector.load %arg6[%c0_26, %c0_27] : memref<128x128xf32, #tpu.memory_space<vmem>>, vector<128x128xf32>
      %cst_28 = arith.constant dense<0.000000e+00> : vector<8x128xf32>
      %35 = tpu.matmul %33, %34, %cst_28 {dimension_numbers = #tpu.dot_dimension_numbers<[1], [0], [0], [1], [0, 0, 1, 1], [], []>} : vector<8x128xf32>, vector<128x128xf32>, vector<8x128xf32> -> vector<8x128xf32>
      %c0_29 = arith.constant 0 : index
      %c0_30 = arith.constant 0 : index
      %36 = vector.load %arg7[%c0_29, %c0_30] : memref<1x128xf32, #tpu.memory_space<vmem>>, vector<1x128xf32>
      %37 = vector.broadcast %36 : vector<1x128xf32> to vector<8x128xf32>
      %38 = arith.addf %35, %37 : vector<8x128xf32>
      %39 = arith.mulf %38, %38 : vector<8x128xf32>
      %cst_31 = arith.constant dense<0.000000e+00> : vector<8xf32>
      %40 = vector.multi_reduction <add>, %39, %cst_31 [1] : vector<8x128xf32> to vector<8xf32>
      %41 = vector.shape_cast %40 : vector<8xf32> to vector<8x1xf32>
      %cst_32 = arith.constant 1.000000e-24 : f32
      %42 = vector.broadcast %cst_32 : f32 to vector<8x1xf32>
      %43 = arith.maximumf %41, %42 : vector<8x1xf32>
      %44 = math.rsqrt %43 : vector<8x1xf32>
      %45 = vector.broadcast %44 : vector<8x1xf32> to vector<8x128xf32>
      %46 = arith.mulf %38, %45 : vector<8x128xf32>
      %c0_33 = arith.constant 0 : index
      %c0_34 = arith.constant 0 : index
      %47 = vector.load %arg8[%c0_33, %c0_34] : memref<8x128xf32, #tpu.memory_space<vmem>>, vector<8x128xf32>
      tpu.vector_store %arg8[%c0_33, %c0_34], %46 {strides = array<i32>} : memref<8x128xf32, #tpu.memory_space<vmem>>, vector<8x128xf32>,
    } else {
    }
    return
  }
  func.func @transform_0(%arg0: i32, %arg1: i32) -> (i32, i32, i32) {
    %c0_i32 = arith.constant 0 : i32
    %c0_i32_0 = arith.constant 0 : i32
    return %arg0, %arg1, %c0_i32 : i32, i32, i32
  }
  func.func @transform_1(%arg0: i32, %arg1: i32) -> (i32, i32) {
    %c0_i32 = arith.constant 0 : i32
    return %arg0, %arg1 : i32, i32
  }
  func.func @transform_2(%arg0: i32, %arg1: i32) -> (i32, i32) {
    %c0_i32 = arith.constant 0 : i32
    %c0_i32_0 = arith.constant 0 : i32
    %c0_i32_1 = arith.constant 0 : i32
    return %c0_i32, %c0_i32_0 : i32, i32
  }
  func.func @transform_3(%arg0: i32, %arg1: i32) -> (i32, i32) {
    %c0_i32 = arith.constant 0 : i32
    %c0_i32_0 = arith.constant 0 : i32
    %c0_i32_1 = arith.constant 0 : i32
    return %c0_i32, %c0_i32_0 : i32, i32
  }
  func.func @transform_4(%arg0: i32, %arg1: i32) -> (i32, i32) {
    %c0_i32 = arith.constant 0 : i32
    %c0_i32_0 = arith.constant 0 : i32
    %c0_i32_1 = arith.constant 0 : i32
    return %c0_i32, %c0_i32_0 : i32, i32
  }
  func.func @transform_5(%arg0: i32, %arg1: i32) -> (i32, i32) {
    %c0_i32 = arith.constant 0 : i32
    %c0_i32_0 = arith.constant 0 : i32
    %c0_i32_1 = arith.constant 0 : i32
    return %c0_i32, %c0_i32_0 : i32, i32
  }
  func.func @transform_6(%arg0: i32, %arg1: i32) -> (i32, i32) {
    %c0_i32 = arith.constant 0 : i32
    %c0_i32_0 = arith.constant 0 : i32
    return %arg0, %c0_i32 : i32, i32
  }
}

</mosaic_0001>

<llo_original>
// kernel: tpu_custom_call.1
$region0: #{tpu_custom_call.1}
  #allocation0 [shape = 'u32[]', space=smem, size = 0x4, offset = 0x4, fixed_abs, tag = 'smem constant byte address 0x4 - core index']
  #allocation1 [shape = 'u32[72,128]{1,0:T(1,128)}', space=vmem, size = 0x9000, scoped, tag = 'internal scratch']
  #allocation2 [shape = 'f32[8,128]{1,0:T(8,128)}', space=vmem, size = 0x1000, scoped, tag = 'scratch operand']
  #allocation3 [shape = 'f32[8,1]{1,0:T(8,128)}', space=vmem, size = 0x1000, scoped, tag = 'scratch operand']
  %s0 = inlined_call_operand.hbm [shape: bf16[8,16,128], index: 0, kind: input, shape index: {}]
  %s1 = inlined_call_operand.hbm [shape: f32[8,16], index: 1, kind: input, shape index: {}]
  %s2 = inlined_call_operand.hbm [shape: f32[128,128], index: 2, kind: input, shape index: {}]
  %s3 = inlined_call_operand.vmem [shape: f32[1,128], index: 3, kind: input, shape index: {}]
  %s4 = inlined_call_operand.hbm [shape: f32[128,128], index: 4, kind: input, shape index: {}]
  %s5 = inlined_call_operand.vmem [shape: f32[1,128], index: 5, kind: input, shape index: {}]
  %s6 = inlined_call_operand.hbm [shape: f32[8,128], index: 6, kind: output, shape index: {}]
  %s7 = sld [smem:[#allocation0]]
  $region58: #{tpu_custom_call.1} parent=0
    _
  %s9 = ssub.s32 1, %s7
  %s10 = scalar_select 0, %s9, %s7
  $region1: #{tpu_custom_call.1} parent=0
    #allocation4 [shape = 'u8[32768]{0}', space=vmem, size = 0x8000, scoped, tag = 'input window, operand 0, single buffered']
    #allocation5 [shape = 's32[1]{0}', space=sflag, size = 0x4, scoped, tag = 'scoped memory for tpu_custom_call.1']
    #allocation6 [shape = 's32[1]{0}', space=sflag, size = 0x4, scoped, tag = 'scoped memory for tpu_custom_call.1']
    #allocation7 [shape = 'u8[4096]{0}', space=vmem, size = 0x1000, scoped, tag = 'input window, operand 1, single buffered']
    #allocation8 [shape = 's32[1]{0}', space=sflag, size = 0x4, scoped, tag = 'scoped memory for tpu_custom_call.1']
    #allocation9 [shape = 'u8[65536]{0}', space=vmem, size = 0x10000, scoped, tag = 'input window, operand 2, single buffered']
    #allocation10 [shape = 'u8[65536]{0}', space=vmem, size = 0x10000, scoped, tag = 'input window, operand 4, single buffered']
    #allocation11 [shape = 's32[1]{0}', space=sflag, size = 0x4, scoped, tag = 'scoped memory for tpu_custom_call.1']
    #allocation12 [shape = 'u8[4096]{0}', space=vmem, size = 0x1000, scoped, tag = 'output window, operand 0, single buffered']
    %11 = vsyncpa [#allocation5], 0
    %12 = vsyncpa [#allocation8], 0
    %13 = vsyncpa [#allocation11], 0
    %14 = vsyncpa [#allocation6], 0
    // Predicated region
    $region2: #{tpu_custom_call.1} parent=1 // pred_check
      _
    $region3: #{tpu_custom_call.1} parent=1 // pred_check_branch
      %16 = sbr.rel (0) target = $region5
    $region4: #{tpu_custom_call.1} parent=1 // pred_region
      %18 = vsyncadd [#allocation5], 0
      %s19 = sshll.u32 %s0, 4
      %s20 = int_to_ptr.hbm [resolvable:$true] %s19
      %s21 = sshll.u32 [#allocation4], 4
      %s22 = int_to_ptr.vmem [resolvable:$true] %s21
      %27 = dma.hbm_to_vmem [thread:$0]  %s20, 1024, %s22, [#allocation5], 64, 64, 4
    $region5: #{tpu_custom_call.1} parent=1 // pred_fallthru
      _
    // Predicated region
    $region6: #{tpu_custom_call.1} parent=1 // pred_check
      _
    $region7: #{tpu_custom_call.1} parent=1 // pred_check_branch
      %29 = sbr.rel (0) target = $region9
    $region8: #{tpu_custom_call.1} parent=1 // pred_region
      %31 = vsyncadd [#allocation8], 0
      %s33 = sshll.u32 %s1, 4
      %s34 = int_to_ptr.hbm [resolvable:$true] %s33
      %s35 = sshll.u32 [#allocation7], 4
      %s36 = int_to_ptr.vmem [resolvable:$true] %s35
      %38 = dma.hbm_to_vmem [thread:$0]  %s34, 128, %s36, [#allocation8]
    $region9: #{tpu_custom_call.1} parent=1 // pred_fallthru
      _
    // Predicated region
    $region10: #{tpu_custom_call.1} parent=1 // pred_check
      _
    $region11: #{tpu_custom_call.1} parent=1 // pred_check_branch
      %40 = sbr.rel (0) target = $region13
    $region12: #{tpu_custom_call.1} parent=1 // pred_region
      %42 = vsyncadd [#allocation8], 0
      %s43 = sshll.u32 %s2, 4
      %s44 = int_to_ptr.hbm [resolvable:$true] %s43
      %s45 = sshll.u32 [#allocation9], 4
      %s46 = int_to_ptr.vmem [resolvable:$true] %s45
      %51 = dma.hbm_to_vmem [thread:$0]  %s44, 2048, %s46, [#allocation8], 128, 128, 8
    $region13: #{tpu_custom_call.1} parent=1 // pred_fallthru
      _
    // Predicated region
    $region14: #{tpu_custom_call.1} parent=1 // pred_check
      _
    $region15: #{tpu_custom_call.1} parent=1 // pred_check_branch
      %53 = sbr.rel (0) target = $region17
    $region16: #{tpu_custom_call.1} parent=1 // pred_region
      _
    $region17: #{tpu_custom_call.1} parent=1 // pred_fallthru
      _
    // Predicated region
    $region18: #{tpu_custom_call.1} parent=1 // pred_check
      _
    $region19: #{tpu_custom_call.1} parent=1 // pred_check_branch
      %55 = sbr.rel (0) target = $region21
    $region20: #{tpu_custom_call.1} parent=1 // pred_region
      %57 = vsyncadd [#allocation11], 0
      %s58 = sshll.u32 %s4, 4
      %s59 = int_to_ptr.hbm [resolvable:$true] %s58
      %s60 = sshll.u32 [#allocation10], 4
      %s61 = int_to_ptr.vmem [resolvable:$true] %s60
      %66 = dma.hbm_to_vmem [thread:$0]  %s59, 2048, %s61, [#allocation11], 128, 128, 8
    $region21: #{tpu_custom_call.1} parent=1 // pred_fallthru
      _
    // Predicated region
    $region22: #{tpu_custom_call.1} parent=1 // pred_check
      _
    $region23: #{tpu_custom_call.1} parent=1 // pred_check_branch
      %68 = sbr.rel (0) target = $region25
    $region24: #{tpu_custom_call.1} parent=1 // pred_region
      _
    $region25: #{tpu_custom_call.1} parent=1 // pred_fallthru
      _
    // Predicated region
    $region26: #{tpu_custom_call.1} parent=1 // pred_check
      _
    $region27: #{tpu_custom_call.1} parent=1 // pred_check_branch
      %70 = sbr.rel (0) target = $region29
    $region28: #{tpu_custom_call.1} parent=1 // pred_region
      %72 = dma.done [#allocation5], 1024
    $region29: #{tpu_custom_call.1} parent=1 // pred_fallthru
      _
    // Predicated region
    $region30: #{tpu_custom_call.1} parent=1 // pred_check
      _
    $region31: #{tpu_custom_call.1} parent=1 // pred_check_branch
      %74 = sbr.rel (0) target = $region33
    $region32: #{tpu_custom_call.1} parent=1 // pred_region
      %76 = dma.done [#allocation8], 128
    $region33: #{tpu_custom_call.1} parent=1 // pred_fallthru
      _
    // Predicated region
    $region34: #{tpu_custom_call.1} parent=1 // pred_check
      _
    $region35: #{tpu_custom_call.1} parent=1 // pred_check_branch
      %78 = sbr.rel (0) target = $region37
    $region36: #{tpu_custom_call.1} parent=1 // pred_region
      %80 = dma.done [#allocation8], 2048
    $region37: #{tpu_custom_call.1} parent=1 // pred_fallthru
      _
    // Predicated region
    $region38: #{tpu_custom_call.1} parent=1 // pred_check
      _
    $region39: #{tpu_custom_call.1} parent=1 // pred_check_branch
      %82 = sbr.rel (0) target = $region41
    $region40: #{tpu_custom_call.1} parent=1 // pred_region
      %84 = dma.done [#allocation11], 2048
    $region41: #{tpu_custom_call.1} parent=1 // pred_fallthru
      _
    %p85 = scmp.eq.s32.totalorder 0, 0
    // Predicated region
    $region42: #{tpu_custom_call.1} parent=1 // pred_check
      %p86 = pneg %p85
    $region43: #{tpu_custom_call.1} parent=1 // pred_check_branch
      %88 = sbr.rel (%p86) target = $region45
    $region44: #{tpu_custom_call.1} parent=1 // pred_region
      %89 = vst [vmem:[#allocation2] sm:$0xff] 0.0
      %vm90 = vcmask 7168
      %91 = vst.msk [vmem:[#allocation3] sm:$0xff] %vm90, 0.0
    $region45: #{tpu_custom_call.1} parent=1 // pred_fallthru
      _
    %v92 = vld [vmem:[#allocation4] sm:$0xf]
    %v93 = vld [vmem:[#allocation4 + $0x4] sm:$0xf]
    %v94 = vld [vmem:[#allocation4 + $0x8] sm:$0xf]
    %v95 = vld [vmem:[#allocation4 + $0xc] sm:$0xf]
    %v96 = vld [vmem:[#allocation4 + $0x10] sm:$0xf]
    %v97 = vld [vmem:[#allocation4 + $0x14] sm:$0xf]
    %v98 = vld [vmem:[#allocation4 + $0x18] sm:$0xf]
    %v99 = vld [vmem:[#allocation4 + $0x1c] sm:$0xf]
    %v100 = vld [vmem:[#allocation4 + $0x20] sm:$0xf]
    %v101 = vld [vmem:[#allocation4 + $0x24] sm:$0xf]
    %v102 = vld [vmem:[#allocation4 + $0x28] sm:$0xf]
    %v103 = vld [vmem:[#allocation4 + $0x2c] sm:$0xf]
    %v104 = vld [vmem:[#allocation4 + $0x30] sm:$0xf]
    %v105 = vld [vmem:[#allocation4 + $0x34] sm:$0xf]
    %v106 = vld [vmem:[#allocation4 + $0x38] sm:$0xf]
    %v107 = vld [vmem:[#allocation4 + $0x3c] sm:$0xf]
    %v108 = vunpack.c.l.bf16 %v92
    %v109 = vunpack.c.l.bf16 %v93
    %v110 = vunpack.c.l.bf16 %v94
    %v111 = vunpack.c.l.bf16 %v95
    %v112 = vunpack.c.l.bf16 %v96
    %v113 = vunpack.c.l.bf16 %v97
    %v114 = vunpack.c.l.bf16 %v98
    %v115 = vunpack.c.l.bf16 %v99
    %v116 = vunpack.c.l.bf16 %v100
    %v117 = vunpack.c.l.bf16 %v101
    %v118 = vunpack.c.l.bf16 %v102
    %v119 = vunpack.c.l.bf16 %v103
    %v120 = vunpack.c.l.bf16 %v104
    %v121 = vunpack.c.l.bf16 %v105
    %v122 = vunpack.c.l.bf16 %v106
    %v123 = vunpack.c.l.bf16 %v107
    %v124 = vld [vmem:[#allocation7] sm:$0xff]
    %v125 = vld [vmem:[#allocation2] sm:$0xff]
    %v126 = vperm.slane %v124, 0
    %v127 = vlaneseq
    %v128 = vshrl.u32 %v127, 7
    %130 = vset.pattern.permute.xlu0 %v128
    %131 = vperm.xlu0 %130, %v126
    %v132 = vpop.permute.xlu0 %131
    %v133 = vlaneseq
    %v134 = vshrl.u32 %v133, 7
    %v135 = vadd.s32 %v134, 8
    %136 = vset.pattern.permute.xlu0 %v135
    %137 = vperm.xlu0 %136, %v126
    %v138 = vpop.permute.xlu0 %137
    %v139 = vperm.slane %v124, 1
    %v140 = vlaneseq
    %v141 = vshrl.u32 %v140, 7
    %143 = vset.pattern.permute.xlu0 %v141
    %144 = vperm.xlu0 %143, %v139
    %v145 = vpop.permute.xlu0 %144
    %v146 = vlaneseq
    %v147 = vshrl.u32 %v146, 7
    %v148 = vadd.s32 %v147, 8
    %149 = vset.pattern.permute.xlu0 %v148
    %150 = vperm.xlu0 %149, %v139
    %v151 = vpop.permute.xlu0 %150
    %v152 = vperm.slane %v124, 2
    %v153 = vlaneseq
    %v154 = vshrl.u32 %v153, 7
    %156 = vset.pattern.permute.xlu0 %v154
    %157 = vperm.xlu0 %156, %v152
    %v158 = vpop.permute.xlu0 %157
    %v159 = vlaneseq
    %v160 = vshrl.u32 %v159, 7
    %v161 = vadd.s32 %v160, 8
    %162 = vset.pattern.permute.xlu0 %v161
    %163 = vperm.xlu0 %162, %v152
    %v164 = vpop.permute.xlu0 %163
    %v165 = vperm.slane %v124, 3
    %v166 = vlaneseq
    %v167 = vshrl.u32 %v166, 7
    %169 = vset.pattern.permute.xlu0 %v167
    %170 = vperm.xlu0 %169, %v165
    %v171 = vpop.permute.xlu0 %170
    %v172 = vlaneseq
    %v173 = vshrl.u32 %v172, 7
    %v174 = vadd.s32 %v173, 8
    %175 = vset.pattern.permute.xlu0 %v174
    %176 = vperm.xlu0 %175, %v165
    %v177 = vpop.permute.xlu0 %176
    %v178 = vperm.slane %v124, 4
    %v179 = vlaneseq
    %v180 = vshrl.u32 %v179, 7
    %182 = vset.pattern.permute.xlu0 %v180
    %183 = vperm.xlu0 %182, %v178
    %v184 = vpop.permute.xlu0 %183
    %v185 = vlaneseq
    %v186 = vshrl.u32 %v185, 7
    %v187 = vadd.s32 %v186, 8
    %188 = vset.pattern.permute.xlu0 %v187
    %189 = vperm.xlu0 %188, %v178
    %v190 = vpop.permute.xlu0 %189
    %v191 = vperm.slane %v124, 5
    %v192 = vlaneseq
    %v193 = vshrl.u32 %v192, 7
    %195 = vset.pattern.permute.xlu0 %v193
    %196 = vperm.xlu0 %195, %v191
    %v197 = vpop.permute.xlu0 %196
    %v198 = vlaneseq
    %v199 = vshrl.u32 %v198, 7
    %v200 = vadd.s32 %v199, 8
    %201 = vset.pattern.permute.xlu0 %v200
    %202 = vperm.xlu0 %201, %v191
    %v203 = vpop.permute.xlu0 %202
    %v204 = vperm.slane %v124, 6
    %v205 = vlaneseq
    %v206 = vshrl.u32 %v205, 7
    %208 = vset.pattern.permute.xlu0 %v206
    %209 = vperm.xlu0 %208, %v204
    %v210 = vpop.permute.xlu0 %209
    %v211 = vlaneseq
    %v212 = vshrl.u32 %v211, 7
    %v213 = vadd.s32 %v212, 8
    %214 = vset.pattern.permute.xlu0 %v213
    %215 = vperm.xlu0 %214, %v204
    %v216 = vpop.permute.xlu0 %215
    %v217 = vperm.slane %v124, 7
    %v218 = vlaneseq
    %v219 = vshrl.u32 %v218, 7
    %221 = vset.pattern.permute.xlu0 %v219
    %222 = vperm.xlu0 %221, %v217
    %v223 = vpop.permute.xlu0 %222
    %v224 = vlaneseq
    %v225 = vshrl.u32 %v224, 7
    %v226 = vadd.s32 %v225, 8
    %227 = vset.pattern.permute.xlu0 %v226
    %228 = vperm.xlu0 %227, %v217
    %v229 = vpop.permute.xlu0 %228
    %v230 = vmul.f32 %v108, %v132
    %v231 = vmul.f32 %v109, %v138
    %v232 = vmul.f32 %v110, %v145
    %v233 = vmul.f32 %v111, %v151
    %v234 = vmul.f32 %v112, %v158
    %v235 = vmul.f32 %v113, %v164
    %v236 = vmul.f32 %v114, %v171
    %v237 = vmul.f32 %v115, %v177
    %v238 = vmul.f32 %v116, %v184
    %v239 = vmul.f32 %v117, %v190
    %v240 = vmul.f32 %v118, %v197
    %v241 = vmul.f32 %v119, %v203
    %v242 = vmul.f32 %v120, %v210
    %v243 = vmul.f32 %v121, %v216
    %v244 = vmul.f32 %v122, %v223
    %v245 = vmul.f32 %v123, %v229
    %v246 = vadd.f32 %v230, %v231
    %v247 = vrot.slane %v246, 4
    %v248 = vadd.f32 %v246, %v247
    %v249 = vrot.slane %v248, 2
    %v250 = vadd.f32 %v248, %v249
    %v251 = vrot.slane %v250, 1
    %v252 = vadd.f32 %v250, %v251
    %v253 = vadd.f32 %v232, %v233
    %v254 = vrot.slane %v253, 4
    %v255 = vadd.f32 %v253, %v254
    %v256 = vrot.slane %v255, 2
    %v257 = vadd.f32 %v255, %v256
    %v258 = vrot.slane %v257, 1
    %v259 = vadd.f32 %v257, %v258
    %v260 = vadd.f32 %v234, %v235
    %v261 = vrot.slane %v260, 4
    %v262 = vadd.f32 %v260, %v261
    %v263 = vrot.slane %v262, 2
    %v264 = vadd.f32 %v262, %v263
    %v265 = vrot.slane %v264, 1
    %v266 = vadd.f32 %v264, %v265
    %v267 = vadd.f32 %v236, %v237
    %v268 = vrot.slane %v267, 4
    %v269 = vadd.f32 %v267, %v268
    %v270 = vrot.slane %v269, 2
    %v271 = vadd.f32 %v269, %v270
    %v272 = vrot.slane %v271, 1
    %v273 = vadd.f32 %v271, %v272
    %v274 = vadd.f32 %v238, %v239
    %v275 = vrot.slane %v274, 4
    %v276 = vadd.f32 %v274, %v275
    %v277 = vrot.slane %v276, 2
    %v278 = vadd.f32 %v276, %v277
    %v279 = vrot.slane %v278, 1
    %v280 = vadd.f32 %v278, %v279
    %v281 = vadd.f32 %v240, %v241
    %v282 = vrot.slane %v281, 4
    %v283 = vadd.f32 %v281, %v282
    %v284 = vrot.slane %v283, 2
    %v285 = vadd.f32 %v283, %v284
    %v286 = vrot.slane %v285, 1
    %v287 = vadd.f32 %v285, %v286
    %v288 = vadd.f32 %v242, %v243
    %v289 = vrot.slane %v288, 4
    %v290 = vadd.f32 %v288, %v289
    %v291 = vrot.slane %v290, 2
    %v292 = vadd.f32 %v290, %v291
    %v293 = vrot.slane %v292, 1
    %v294 = vadd.f32 %v292, %v293
    %v295 = vadd.f32 %v244, %v245
    %v296 = vrot.slane %v295, 4
    %v297 = vadd.f32 %v295, %v296
    %v298 = vrot.slane %v297, 2
    %v299 = vadd.f32 %v297, %v298
    %v300 = vrot.slane %v299, 1
    %v301 = vadd.f32 %v299, %v300
    %vm310 = vcmask 1041409
    %v311 = vsel %vm310, %v259, %v252
    %vm312 = vcmask 1042434
    %v313 = vsel %vm312, %v266, %v311
    %vm314 = vcmask 1043459
    %v315 = vsel %vm314, %v273, %v313
    %vm316 = vcmask 1044484
    %v317 = vsel %vm316, %v280, %v315
    %vm318 = vcmask 1045509
    %v319 = vsel %vm318, %v287, %v317
    %vm320 = vcmask 1046534
    %v321 = vsel %vm320, %v294, %v319
    %vm322 = vcmask 1047559
    %v323 = vsel %vm322, %v301, %v321
    %v325 = vadd.f32 %v125, %v323
    %326 = vst [vmem:[#allocation2] sm:$0xff] %v325
    %v327 = vld [vmem:[#allocation3] sm:$0xff]
    %vm328 = vcmask 130048
    %v329 = vsel %vm328, %v124, 0.0
    %330 = vadd.xlane.f32.xlu0 %v329
    %v331 = vpop.xlane.xlu0 %330
    %v332 = vadd.f32 %v327, %v331
    %vm333 = vcmask 7168
    %334 = vst.msk [vmem:[#allocation3] sm:$0xff] %vm333, %v332
    // Predicated region
    $region46: #{tpu_custom_call.1} parent=1 // pred_check
      %p335 = pneg %p85
    $region47: #{tpu_custom_call.1} parent=1 // pred_check_branch
      %337 = sbr.rel (%p335) target = $region49
    $region48: #{tpu_custom_call.1} parent=1 // pred_region
      %v338 = vld [vmem:[#allocation3] sm:$0xff]
      %v339 = vmax.f32 %v338, 1.0
      %v340 = vld [vmem:[#allocation2] sm:$0xff]
      %v341 = vrcp.pop %v339
      %v342 = vmul.f32 %v339, %v341
      %v343 = vsub.f32 1.0, %v342
      %v344 = vmul.f32 %v341, %v343
      %v345 = vadd.f32 %v341, %v344
      %vm346 = vweird.f32 %v339
      %vm347 = vweird.f32 %v341
      %vm348 = vmor %vm346, %vm347
      %v349 = vsel %vm348, %v341, %v345
      %v350 = vand.u32 2147483647, %v339
      %vm351 = vcmp.eq.f32.partialorder %v350, 8.507059e+37
      %v352 = vand.u32 %v339, 2147483648
      %v353 = vor.u32 1.1754944e-38, %v352
      %v354 = vsel %vm351, %v353, %v349
      %356 = vset.pattern.permute.xlu0 0
      %357 = vperm.xlu0 %356, %v354
      %v358 = vpop.permute.xlu0 %357
      %v360 = vmul.f32 %v340, %v358
      %v361 = vld [vmem:[#allocation9] sm:$0xff]
      %v362 = vld [vmem:[#allocation9 + $0x8] sm:$0xff]
      %v363 = vld [vmem:[#allocation9 + $0x10] sm:$0xff]
      %v364 = vld [vmem:[#allocation9 + $0x18] sm:$0xff]
      %v365 = vld [vmem:[#allocation9 + $0x20] sm:$0xff]
      %v366 = vld [vmem:[#allocation9 + $0x28] sm:$0xff]
      %v367 = vld [vmem:[#allocation9 + $0x30] sm:$0xff]
      %v368 = vld [vmem:[#allocation9 + $0x38] sm:$0xff]
      %v369 = vld [vmem:[#allocation9 + $0x40] sm:$0xff]
      %v370 = vld [vmem:[#allocation9 + $0x48] sm:$0xff]
      %v371 = vld [vmem:[#allocation9 + $0x50] sm:$0xff]
      %v372 = vld [vmem:[#allocation9 + $0x58] sm:$0xff]
      %v373 = vld [vmem:[#allocation9 + $0x60] sm:$0xff]
      %v374 = vld [vmem:[#allocation9 + $0x68] sm:$0xff]
      %v375 = vld [vmem:[#allocation9 + $0x70] sm:$0xff]
      %v376 = vld [vmem:[#allocation9 + $0x78] sm:$0xff]
      %v377 = vld [vmem:[%s3] sm:$0x1]
      %v379 = vperm.slane %v377, 0
      %381 = vmatpush.msra.mxu0 %v376
      %382 = vmatpush.msra.mxu0 %v375
      %383 = vmatpush.msra.mxu0 %v374
      %384 = vmatpush.msra.mxu0 %v373
      %385 = vmatpush.msra.mxu0 %v372
      %386 = vmatpush.msra.mxu0 %v371
      %387 = vmatpush.msra.mxu0 %v370
      %388 = vmatpush.msra.mxu0 %v369
      %389 = vmatpush.msra.mxu0 %v368
      %390 = vmatpush.msra.mxu0 %v367
      %391 = vmatpush.msra.mxu0 %v366
      %392 = vmatpush.msra.mxu0 %v365
      %393 = vmatpush.msra.mxu0 %v364
      %394 = vmatpush.msra.mxu0 %v363
      %395 = vmatpush.msra.mxu0 %v362
      %396 = vmatpush.msra.mxu0 %v361
      %397 = vmatmul.f32.gmra.mxu0 %v360
      %v398 = vpop.f32.mrf.mxu0
      %v399 = vadd.f32 %v379, %v398
      %400 = vdwg.mxu0
      %v401 = vtanh.pop %v399
      %v402 = vld [vmem:[#allocation10] sm:$0xff]
      %v403 = vld [vmem:[#allocation10 + $0x8] sm:$0xff]
      %v404 = vld [vmem:[#allocation10 + $0x10] sm:$0xff]
      %v405 = vld [vmem:[#allocation10 + $0x18] sm:$0xff]
      %v406 = vld [vmem:[#allocation10 + $0x20] sm:$0xff]
      %v407 = vld [vmem:[#allocation10 + $0x28] sm:$0xff]
      %v408 = vld [vmem:[#allocation10 + $0x30] sm:$0xff]
      %v409 = vld [vmem:[#allocation10 + $0x38] sm:$0xff]
      %v410 = vld [vmem:[#allocation10 + $0x40] sm:$0xff]
      %v411 = vld [vmem:[#allocation10 + $0x48] sm:$0xff]
      %v412 = vld [vmem:[#allocation10 + $0x50] sm:$0xff]
      %v413 = vld [vmem:[#allocation10 + $0x58] sm:$0xff]
      %v414 = vld [vmem:[#allocation10 + $0x60] sm:$0xff]
      %v415 = vld [vmem:[#allocation10 + $0x68] sm:$0xff]
      %v416 = vld [vmem:[#allocation10 + $0x70] sm:$0xff]
      %v417 = vld [vmem:[#allocation10 + $0x78] sm:$0xff]
      %v418 = vld [vmem:[%s5] sm:$0x1]
      %v420 = vperm.slane %v418, 0
      %422 = vmatpush.msra.mxu0 %v417
      %423 = vmatpush.msra.mxu0 %v416
      %424 = vmatpush.msra.mxu0 %v415
      %425 = vmatpush.msra.mxu0 %v414
      %426 = vmatpush.msra.mxu0 %v413
      %427 = vmatpush.msra.mxu0 %v412
      %428 = vmatpush.msra.mxu0 %v411
      %429 = vmatpush.msra.mxu0 %v410
      %430 = vmatpush.msra.mxu0 %v409
      %431 = vmatpush.msra.mxu0 %v408
      %432 = vmatpush.msra.mxu0 %v407
      %433 = vmatpush.msra.mxu0 %v406
      %434 = vmatpush.msra.mxu0 %v405
      %435 = vmatpush.msra.mxu0 %v404
      %436 = vmatpush.msra.mxu0 %v403
      %437 = vmatpush.msra.mxu0 %v402
      %438 = vmatmul.f32.gmra.mxu0 %v401
      %v439 = vpop.f32.mrf.mxu0
      %v440 = vadd.f32 %v420, %v439
      %441 = vdwg.mxu0
      %v442 = vmul.f32 %v440, %v440
      %443 = vadd.xlane.f32.xlu0 %v442
      %v444 = vpop.xlane.xlu0 %443
      %v445 = vmax.f32 %v444, 1e-24
      %v446 = vrsqrt.pop %v445
      %v447 = vmul.f32 %v446, %v445
      %v448 = vmul.f32 %v447, %v446
      %v449 = vmul.f32 0.5, %v448
      %v450 = vsub.f32 1.5, %v449
      %v451 = vmul.f32 %v446, %v450
      %vm452 = vweird.f32 %v445
      %vm453 = vweird.f32 %v446
      %vm454 = vmor %vm452, %vm453
      %v455 = vsel %vm454, %v446, %v451
      %v456 = vmul.f32 %v440, %v455
      %457 = vst [vmem:[#allocation12] sm:$0xff] %v456
    $region49: #{tpu_custom_call.1} parent=1 // pred_fallthru
      _
    // Predicated region
    $region50: #{tpu_custom_call.1} parent=1 // pred_check
      _
    $region51: #{tpu_custom_call.1} parent=1 // pred_check_branch
      %459 = sbr.rel (0) target = $region53
    $region52: #{tpu_custom_call.1} parent=1 // pred_region
      %461 = vsyncadd [#allocation6], 0
      %s463 = sshll.u32 [#allocation12], 4
      %s464 = int_to_ptr.vmem [resolvable:$true] %s463
      %s465 = sshll.u32 %s6, 4
      %s466 = int_to_ptr.hbm [resolvable:$true] %s465
      %468 = dma.vmem_to_hbm [thread:$0]  %s464, 128, %s466, [#allocation6]
    $region53: #{tpu_custom_call.1} parent=1 // pred_fallthru
      _
    // Predicated region
    $region54: #{tpu_custom_call.1} parent=1 // pred_check
      _
    $region55: #{tpu_custom_call.1} parent=1 // pred_check_branch
      %470 = sbr.rel (0) target = $region57
    $region56: #{tpu_custom_call.1} parent=1 // pred_region
      %472 = dma.done [#allocation6], 128
    $region57: #{tpu_custom_call.1} parent=1 // pred_fallthru
      _
    %473 = vsyncpa [#allocation5], 1
    %474 = vsyncpa [#allocation8], 1
    %475 = vsyncpa [#allocation11], 1
    %476 = vsyncpa [#allocation6], 1

</llo_original>
